<compile_context>
chip_gen: v7x
topology: tpu7x:2x2x1
jax: 0.10.0
libtpu: 0.0.40
codegen_flags: <defaults>
</compile_context>

<pallas_src>
import jax
import jax.numpy as jnp
from jax.experimental import pallas as pl
from jax.experimental.pallas import tpu as pltpu


def _cdiv(a, b):
    return (a + b - 1) // b


def _round_up(v, m):
    return _cdiv(v, m) * m


# ---------------------------------------------------------------------------
# Kernel
# ---------------------------------------------------------------------------
def swiglu_kernel(x_ref, w1_ref, b1_ref, w2_ref, b2_ref, w3_ref, b3_ref,
                  o_ref, acc_ref):
    # x:  [TB, D_in_p] bf16
    # w1/w2: [D_in_p, TH] bf16       b1/b2: [1, TH] fp32
    # w3: [TH, D_out_p] bf16         b3:    [1, D_out_p] fp32
    # o:  [TB, D_out_p] out_dtype    acc:   [TB, D_out_p] fp32 scratch
    k = pl.program_id(1)

    @pl.when(k == 0)
    def _():
        acc_ref[...] = jnp.zeros_like(acc_ref)

    x = x_ref[...]
    # Gate / linear branches for this H chunk (fp32 accumulation on the MXU).
    h1 = jnp.dot(x, w1_ref[...], preferred_element_type=jnp.float32) + b1_ref[...]
    h2 = jnp.dot(x, w2_ref[...], preferred_element_type=jnp.float32) + b2_ref[...]
    gate = h1 * jax.nn.sigmoid(h1)              # SiLU in fp32 (sigmoid -> EUP)
    fused = (gate * h2).astype(jnp.bfloat16)    # bf16 operand for the MXU
    acc_ref[...] += jnp.dot(fused, w3_ref[...], preferred_element_type=jnp.float32)

    @pl.when(k == pl.num_programs(1) - 1)
    def _():
        o_ref[...] = (acc_ref[...] + b3_ref[...]).astype(o_ref.dtype)


# ---------------------------------------------------------------------------
# One-time parameter prep (fuse / transpose / pad / cast) outside the hot path
# ---------------------------------------------------------------------------
def prepare_swiglu_params(w1, b1, w2, b2, w3, b3, *, param_dtype=jnp.bfloat16):
    """w1, w2: [H, D_in]; b1, b2: [H]; w3: [D_out, H]; b3: [D_out] (torch layout)."""
    H, D_in = w1.shape
    D_out = w3.shape[0]
    D_in_p = _round_up(D_in, 128)
    H_p = _round_up(H, 128)
    D_out_p = _round_up(D_out, 128)

    def pad_to(a, shape):
        return jnp.pad(a, tuple((0, t - s) for s, t in zip(a.shape, shape)))

    # Zero padding keeps padded D_in rows / H columns / D_out columns inert.
    w1p = pad_to(w1.T.astype(jnp.float32), (D_in_p, H_p)).astype(param_dtype)
    w2p = pad_to(w2.T.astype(jnp.float32), (D_in_p, H_p)).astype(param_dtype)
    w3p = pad_to(w3.T.astype(jnp.float32), (H_p, D_out_p)).astype(param_dtype)
    b1p = pad_to(b1.astype(jnp.float32)[None, :], (1, H_p))
    b2p = pad_to(b2.astype(jnp.float32)[None, :], (1, H_p))
    b3p = pad_to(b3.astype(jnp.float32)[None, :], (1, D_out_p))

    return {
        "w1": w1p, "b1": b1p,
        "w2": w2p, "b2": b2p,
        "w3": w3p, "b3": b3p,
        "dims": (D_in, H, D_out, D_in_p, H_p, D_out_p),
    }


# ---------------------------------------------------------------------------
# Generation-aware VMEM budgeting + tile planning
# ---------------------------------------------------------------------------
def _vmem_limit_bytes():
    """Request ~80% of physical VMEM (48-56 MiB on v7x, ~100 MiB on v5e/v6e)."""
    try:
        cap = int(pltpu.get_tpu_info().vmem_capacity_bytes)
        if cap > 0:
            return int(cap * 0.8)
    except Exception:
        pass
    try:
        kind = jax.devices()[0].device_kind.lower()
        if "v7" in kind:
            return 52 * 1024 * 1024           # v7x: 64 MiB physical per TC
        if "v6" in kind or "v5e" in kind or "v5 lite" in kind or "v5lite" in kind:
            return 100 * 1024 * 1024          # v5e / v6e: 128 MiB physical
    except Exception:
        pass
    return None                               # unknown: keep compiler default


def _plan_tiles(B, D_in_p, H_p, D_out_p, out_bytes, block_b, vmem_budget):
    """Pick (TB, TH, n_h): batch tile rows, H chunk width, number of H chunks."""
    # Batch tiles: cap at block_b rows, minimise tail padding, and give the
    # v7x megacore at least 2 independent tiles when B permits.
    n_b = _cdiv(B, block_b)
    if B >= 16:
        n_b = max(n_b, 2)
    tb = _round_up(_cdiv(B, n_b), 8)

    # H chunk must be a multiple of 128 that divides H_p (prep-time padding is
    # fixed), so enumerate divisors of H_p / 128.
    m = H_p // 128
    divisors = [d for d in range(1, m + 1) if m % d == 0]

    def fits(tb_, th, n_h):
        wbuf = 1 if n_h == 1 else 2            # single-buffer constant weights
        v = 0
        v += 2 * tb_ * D_in_p * 2              # x tile, double-buffered bf16
        v += wbuf * 2 * D_in_p * th * 2        # w1 + w2 chunks (bf16)
        v += wbuf * 2 * th * 4                 # b1 + b2 chunks (fp32)
        v += wbuf * th * D_out_p * 2           # w3 chunk (bf16)
        v += D_out_p * 4                       # b3 (single-buffered fp32)
        v += 2 * tb_ * D_out_p * out_bytes     # output tile, double-buffered
        v += tb_ * D_out_p * 4                 # fp32 accumulator scratch
        v += 3 * tb_ * th * 4                  # h1/h2/gating fp32 intermediates
        return v <= vmem_budget

    while True:
        for n_h in divisors:
            th = H_p // n_h
            if fits(tb, th, n_h):
                return tb, th, n_h
        if tb <= 8:
            # Smallest plan; trust the (conservative) vmem_limit at compile time.
            return tb, 128, m
        tb = max(8, _round_up(tb // 2, 8))


# ---------------------------------------------------------------------------
# Forward wrapper
# ---------------------------------------------------------------------------
def swiglu_forward(x, params, *, block_b=256, out_dtype=None):
    """x: [B, D_in] float. Returns [B, D_out] in out_dtype (default x.dtype)."""
    D_in, H, D_out, D_in_p, H_p, D_out_p = params["dims"]
    B = x.shape[0]
    out_dtype = x.dtype if out_dtype is None else out_dtype
    out_bytes = jnp.dtype(out_dtype).itemsize

    vmem_limit = _vmem_limit_bytes()
    budget = int(0.75 * (vmem_limit if vmem_limit is not None else 32 * 1024 * 1024))

    TB, TH, n_h = _plan_tiles(B, D_in_p, H_p, D_out_p, out_bytes, block_b, budget)
    B_p = _round_up(B, TB)
    grid = (B_p // TB, n_h)

    # bf16 MXU operand; pad batch / lane dims only when it is not a no-op.
    x_p = x.astype(jnp.bfloat16)
    if B_p != B or D_in_p != D_in:
        x_p = jnp.pad(x_p, ((0, B_p - B), (0, D_in_p - D_in)))

    resident = {"pipeline_mode": pl.Buffered(1)}                   # constant index
    w_mode = {"pipeline_mode": pl.Buffered(1)} if n_h == 1 else {}  # resident if 1 chunk

    # TODO(synk): if x-tile DMA ever shows up as exposed on v5e (tiny H/D_in),
    # deepen only the x BlockSpec with pipeline_mode=pl.Buffered(3).
    out_p = pl.pallas_call(
        swiglu_kernel,
        out_shape=jax.ShapeDtypeStruct((B_p, D_out_p), out_dtype),
        grid=grid,
        in_specs=[
            pl.BlockSpec((TB, D_in_p), lambda i, k: (i, 0)),             # x streams per row tile
            pl.BlockSpec((D_in_p, TH), lambda i, k: (0, k), **w_mode),   # W1 chunk
            pl.BlockSpec((1, TH), lambda i, k: (0, k), **w_mode),        # b1 chunk
            pl.BlockSpec((D_in_p, TH), lambda i, k: (0, k), **w_mode),   # W2 chunk
            pl.BlockSpec((1, TH), lambda i, k: (0, k), **w_mode),        # b2 chunk
            pl.BlockSpec((TH, D_out_p), lambda i, k: (k, 0), **w_mode),  # W3 chunk
            pl.BlockSpec((1, D_out_p), lambda i, k: (0, 0), **resident), # b3 (constant)
        ],
        out_specs=pl.BlockSpec((TB, D_out_p), lambda i, k: (i, 0)),
        scratch_shapes=[pltpu.VMEM((TB, D_out_p), jnp.float32)],
        compiler_params=pltpu.CompilerParams(
            dimension_semantics=("parallel", "arbitrary"),
            vmem_limit_bytes=vmem_limit,
        ),
    )(x_p, params["w1"], params["b1"], params["w2"], params["b2"],
      params["w3"], params["b3"])

    # Strip batch / lane padding only when needed.
    if B_p != B or D_out_p != D_out:
        out_p = out_p[:B, :D_out]
    return out_p


def swiglu_ref(x, w1, b1, w2, b2, w3, b3):
    h1 = x @ w1.T + b1
    gate = h1 * jax.nn.sigmoid(h1)
    lin = x @ w2.T + b2
    return (gate * lin) @ w3.T + b3


if __name__ == "__main__":
    B, D_in, H, D_out = 8, 32, 64, 32

    key = jax.random.PRNGKey(0)
    kx, k1, k2, k3, k4, k5, k6 = jax.random.split(key, 7)

    x = jax.random.normal(kx, (B, D_in), dtype=jnp.float32)

    # Deterministic init mimicking nn.Linear's uniform(-1/sqrt(fan_in), 1/sqrt(fan_in)).
    def init_linear(kw, kb, out_f, in_f):
        bound = 1.0 / jnp.sqrt(in_f)
        w = jax.random.uniform(kw, (out_f, in_f), jnp.float32, -bound, bound)
        b = jax.random.uniform(kb, (out_f,), jnp.float32, -bound, bound)
        return w, b

    w1, b1 = init_linear(k1, k2, H, D_in)
    w2, b2 = init_linear(k3, k4, H, D_in)
    w3, b3 = init_linear(k5, k6, D_out, H)

    # One-time parameter prep (transpose / pad / bf16-cast), then forward.
    params = prepare_swiglu_params(w1, b1, w2, b2, w3, b3)
    out = swiglu_forward(x, params)
    out = jax.block_until_ready(out)

    ref = swiglu_ref(x, w1, b1, w2, b2, w3, b3)
    assert out.shape == (B, D_out)
    # bf16 MXU operands with fp32 accumulation -> ~1e-2-level diffs vs fp32 ref.
    assert jnp.allclose(out, ref, atol=5e-2, rtol=5e-2), float(
        jnp.max(jnp.abs(out - ref))
    )

    print("KERNEL_OK")
</pallas_src>

<mosaic_0001>
module attributes {stable_mosaic.version = 11 : i64} {
  func.func @swiglu_kernel(%arg0: i32, %arg1: i32, %arg2: memref<8x128xbf16, #tpu.memory_space<vmem>>, %arg3: memref<128x128xbf16, #tpu.memory_space<vmem>>, %arg4: memref<1x128xf32, #tpu.memory_space<vmem>>, %arg5: memref<128x128xbf16, #tpu.memory_space<vmem>>, %arg6: memref<1x128xf32, #tpu.memory_space<vmem>>, %arg7: memref<128x128xbf16, #tpu.memory_space<vmem>>, %arg8: memref<1x128xf32, #tpu.memory_space<vmem>>, %arg9: memref<8x128xf32, #tpu.memory_space<vmem>>, %arg10: memref<8x128xf32, #tpu.memory_space<vmem>>) attributes {dimension_semantics = [#tpu.dimension_semantics<parallel>, #tpu.dimension_semantics<arbitrary>], iteration_bounds = array<i64: 1, 1>, scalar_prefetch = 0 : i64, scratch_operands = 1 : i64, tpu.core_type = #tpu.core_type<tc>, window_params = [{transform_indices = @transform_0, window_bounds = array<i64: 8, 128>}, {pipeline_mode = #tpu.pipeline_mode<synchronous>, transform_indices = @transform_1, window_bounds = array<i64: 128, 128>}, {pipeline_mode = #tpu.pipeline_mode<synchronous>, transform_indices = @transform_2, window_bounds = array<i64: 1, 128>}, {pipeline_mode = #tpu.pipeline_mode<synchronous>, transform_indices = @transform_3, window_bounds = array<i64: 128, 128>}, {pipeline_mode = #tpu.pipeline_mode<synchronous>, transform_indices = @transform_4, window_bounds = array<i64: 1, 128>}, {pipeline_mode = #tpu.pipeline_mode<synchronous>, transform_indices = @transform_5, window_bounds = array<i64: 128, 128>}, {pipeline_mode = #tpu.pipeline_mode<synchronous>, transform_indices = @transform_6, window_bounds = array<i64: 1, 128>}, {transform_indices = @transform_7, window_bounds = array<i64: 8, 128>}]} {
    %c0_i32 = arith.constant 0 : i32
    %0 = arith.cmpi eq, %arg1, %c0_i32 : i32
    %1 = arith.extui %0 : i1 to i32
    %c0_i32_0 = arith.constant 0 : i32
    %2 = arith.cmpi ne, %1, %c0_i32_0 : i32
    scf.if %2 {
      %cst_21 = arith.constant 0.000000e+00 : f32
      %30 = vector.broadcast %cst_21 : f32 to vector<8x128xf32>
      %c0_22 = arith.constant 0 : index
      %c0_23 = arith.constant 0 : index
      %31 = vector.load %arg10[%c0_22, %c0_23] : memref<8x128xf32, #tpu.memory_space<vmem>>, vector<8x128xf32>
      tpu.vector_store %arg10[%c0_22, %c0_23], %30 {strides = array<i32>} : memref<8x128xf32, #tpu.memory_space<vmem>>, vector<8x128xf32>,
    } else {
    }
    %c0 = arith.constant 0 : index
    %c0_1 = arith.constant 0 : index
    %3 = vector.load %arg2[%c0, %c0_1] : memref<8x128xbf16, #tpu.memory_space<vmem>>, vector<8x128xbf16>
    %c0_2 = arith.constant 0 : index
    %c0_3 = arith.constant 0 : index
    %4 = vector.load %arg3[%c0_2, %c0_3] : memref<128x128xbf16, #tpu.memory_space<vmem>>, vector<128x128xbf16>
    %cst = arith.constant dense<0.000000e+00> : vector<8x128xf32>
    %5 = tpu.matmul %3, %4, %cst {dimension_numbers = #tpu.dot_dimension_numbers<[1], [0], [0], [1], [0, 0, 1, 1], [], []>} : vector<8x128xbf16>, vector<128x128xbf16>, vector<8x128xf32> -> vector<8x128xf32>
    %c0_4 = arith.constant 0 : index
    %c0_5 = arith.constant 0 : index
    %6 = vector.load %arg4[%c0_4, %c0_5] : memref<1x128xf32, #tpu.memory_space<vmem>>, vector<1x128xf32>
    %7 = vector.broadcast %6 : vector<1x128xf32> to vector<8x128xf32>
    %8 = arith.addf %5, %7 : vector<8x128xf32>
    %c0_6 = arith.constant 0 : index
    %c0_7 = arith.constant 0 : index
    %9 = vector.load %arg5[%c0_6, %c0_7] : memref<128x128xbf16, #tpu.memory_space<vmem>>, vector<128x128xbf16>
    %cst_8 = arith.constant dense<0.000000e+00> : vector<8x128xf32>
    %10 = tpu.matmul %3, %9, %cst_8 {dimension_numbers = #tpu.dot_dimension_numbers<[1], [0], [0], [1], [0, 0, 1, 1], [], []>} : vector<8x128xbf16>, vector<128x128xbf16>, vector<8x128xf32> -> vector<8x128xf32>
    %c0_9 = arith.constant 0 : index
    %c0_10 = arith.constant 0 : index
    %11 = vector.load %arg6[%c0_9, %c0_10] : memref<1x128xf32, #tpu.memory_space<vmem>>, vector<1x128xf32>
    %12 = vector.broadcast %11 : vector<1x128xf32> to vector<8x128xf32>
    %13 = arith.addf %10, %12 : vector<8x128xf32>
    %14 = arith.negf %8 : vector<8x128xf32>
    %15 = math.exp %14 : vector<8x128xf32>
    %cst_11 = arith.constant 1.000000e+00 : f32
    %16 = vector.broadcast %cst_11 : f32 to vector<8x128xf32>
    %17 = arith.addf %16, %15 : vector<8x128xf32>
    %18 = arith.divf %16, %17 : vector<8x128xf32>
    %19 = arith.mulf %8, %18 : vector<8x128xf32>
    %20 = arith.mulf %19, %13 : vector<8x128xf32>
    %21 = arith.truncf %20 : vector<8x128xf32> to vector<8x128xbf16>
    %c0_12 = arith.constant 0 : index
    %c0_13 = arith.constant 0 : index
    %22 = vector.load %arg10[%c0_12, %c0_13] : memref<8x128xf32, #tpu.memory_space<vmem>>, vector<8x128xf32>
    %c0_14 = arith.constant 0 : index
    %c0_15 = arith.constant 0 : index
    %23 = vector.load %arg7[%c0_14, %c0_15] : memref<128x128xbf16, #tpu.memory_space<vmem>>, vector<128x128xbf16>
    %cst_16 = arith.constant dense<0.000000e+00> : vector<8x128xf32>
    %24 = tpu.matmul %21, %23, %cst_16 {dimension_numbers = #tpu.dot_dimension_numbers<[1], [0], [0], [1], [0, 0, 1, 1], [], []>} : vector<8x128xbf16>, vector<128x128xbf16>, vector<8x128xf32> -> vector<8x128xf32>
    %25 = arith.addf %22, %24 : vector<8x128xf32>
    %c0_17 = arith.constant 0 : index
    %c0_18 = arith.constant 0 : index
    %26 = vector.load %arg10[%c0_17, %c0_18] : memref<8x128xf32, #tpu.memory_space<vmem>>, vector<8x128xf32>
    tpu.vector_store %arg10[%c0_17, %c0_18], %25 {strides = array<i32>} : memref<8x128xf32, #tpu.memory_space<vmem>>, vector<8x128xf32>,
    %c0_i32_19 = arith.constant 0 : i32
    %27 = arith.cmpi eq, %arg1, %c0_i32_19 : i32
    %28 = arith.extui %27 : i1 to i32
    %c0_i32_20 = arith.constant 0 : i32
    %29 = arith.cmpi ne, %28, %c0_i32_20 : i32
    scf.if %29 {
      %c0_21 = arith.constant 0 : index
      %c0_22 = arith.constant 0 : index
      %30 = vector.load %arg10[%c0_21, %c0_22] : memref<8x128xf32, #tpu.memory_space<vmem>>, vector<8x128xf32>
      %c0_23 = arith.constant 0 : index
      %c0_24 = arith.constant 0 : index
      %31 = vector.load %arg8[%c0_23, %c0_24] : memref<1x128xf32, #tpu.memory_space<vmem>>, vector<1x128xf32>
      %32 = vector.broadcast %31 : vector<1x128xf32> to vector<8x128xf32>
      %33 = arith.addf %30, %32 : vector<8x128xf32>
      %c0_25 = arith.constant 0 : index
      %c0_26 = arith.constant 0 : index
      %34 = vector.load %arg9[%c0_25, %c0_26] : memref<8x128xf32, #tpu.memory_space<vmem>>, vector<8x128xf32>
      tpu.vector_store %arg9[%c0_25, %c0_26], %33 {strides = array<i32>} : memref<8x128xf32, #tpu.memory_space<vmem>>, vector<8x128xf32>,
    } else {
    }
    return
  }
  func.func @transform_0(%arg0: i32, %arg1: i32) -> (i32, i32) {
    %c0_i32 = arith.constant 0 : i32
    %c0_i32_0 = arith.constant 0 : i32
    return %arg0, %c0_i32 : i32, i32
  }
  func.func @transform_1(%arg0: i32, %arg1: i32) -> (i32, i32) {
    %c0_i32 = arith.constant 0 : i32
    %c0_i32_0 = arith.constant 0 : i32
    return %c0_i32, %arg1 : i32, i32
  }
  func.func @transform_2(%arg0: i32, %arg1: i32) -> (i32, i32) {
    %c0_i32 = arith.constant 0 : i32
    %c0_i32_0 = arith.constant 0 : i32
    return %c0_i32, %arg1 : i32, i32
  }
  func.func @transform_3(%arg0: i32, %arg1: i32) -> (i32, i32) {
    %c0_i32 = arith.constant 0 : i32
    %c0_i32_0 = arith.constant 0 : i32
    return %c0_i32, %arg1 : i32, i32
  }
  func.func @transform_4(%arg0: i32, %arg1: i32) -> (i32, i32) {
    %c0_i32 = arith.constant 0 : i32
    %c0_i32_0 = arith.constant 0 : i32
    return %c0_i32, %arg1 : i32, i32
  }
  func.func @transform_5(%arg0: i32, %arg1: i32) -> (i32, i32) {
    %c0_i32 = arith.constant 0 : i32
    %c0_i32_0 = arith.constant 0 : i32
    return %arg1, %c0_i32 : i32, i32
  }
  func.func @transform_6(%arg0: i32, %arg1: i32) -> (i32, i32) {
    %c0_i32 = arith.constant 0 : i32
    %c0_i32_0 = arith.constant 0 : i32
    %c0_i32_1 = arith.constant 0 : i32
    return %c0_i32, %c0_i32_0 : i32, i32
  }
  func.func @transform_7(%arg0: i32, %arg1: i32) -> (i32, i32) {
    %c0_i32 = arith.constant 0 : i32
    %c0_i32_0 = arith.constant 0 : i32
    return %arg0, %c0_i32 : i32, i32
  }
}

</mosaic_0001>

<llo_original>
// kernel: tpu_custom_call.1
$region0: #{tpu_custom_call.1}
  #allocation0 [shape = 'u32[]', space=smem, size = 0x4, offset = 0x4, fixed_abs, tag = 'smem constant byte address 0x4 - core index']
  #allocation1 [shape = 'u32[144,128]{1,0:T(1,128)}', space=vmem, size = 0x12000, scoped, tag = 'internal scratch']
  #allocation2 [shape = 'f32[8,128]{1,0:T(8,128)}', space=vmem, size = 0x1000, scoped, tag = 'scratch operand']
  %s0 = inlined_call_operand.hbm [shape: bf16[8,128], index: 0, kind: input, shape index: {}]
  %s1 = inlined_call_operand.hbm [shape: bf16[128,128], index: 1, kind: input, shape index: {}]
  %s2 = inlined_call_operand.vmem [shape: f32[1,128], index: 2, kind: input, shape index: {}]
  %s3 = inlined_call_operand.hbm [shape: bf16[128,128], index: 3, kind: input, shape index: {}]
  %s4 = inlined_call_operand.vmem [shape: f32[1,128], index: 4, kind: input, shape index: {}]
  %s5 = inlined_call_operand.hbm [shape: bf16[128,128], index: 5, kind: input, shape index: {}]
  %s6 = inlined_call_operand.vmem [shape: f32[1,128], index: 6, kind: input, shape index: {}]
  %s7 = inlined_call_operand.hbm [shape: f32[8,128], index: 7, kind: output, shape index: {}]
  %s8 = sld [smem:[#allocation0]]
  $region62: #{tpu_custom_call.1} parent=0
    _
  %s10 = ssub.s32 1, %s8
  %s11 = scalar_select 0, %s10, %s8
  $region1: #{tpu_custom_call.1} parent=0
    #allocation3 [shape = 'u8[2048]{0}', space=vmem, size = 0x800, scoped, tag = 'input window, operand 0, single buffered']
    #allocation4 [shape = 's32[1]{0}', space=sflag, size = 0x4, scoped, tag = 'scoped memory for tpu_custom_call.1']
    #allocation5 [shape = 's32[1]{0}', space=sflag, size = 0x4, scoped, tag = 'scoped memory for tpu_custom_call.1']
    #allocation6 [shape = 'u8[32768]{0}', space=vmem, size = 0x8000, scoped, tag = 'input window, operand 1, single buffered']
    #allocation7 [shape = 's32[1]{0}', space=sflag, size = 0x4, scoped, tag = 'scoped memory for tpu_custom_call.1']
    #allocation8 [shape = 'u8[32768]{0}', space=vmem, size = 0x8000, scoped, tag = 'input window, operand 3, single buffered']
    #allocation9 [shape = 'u8[32768]{0}', space=vmem, size = 0x8000, scoped, tag = 'input window, operand 5, single buffered']
    #allocation10 [shape = 's32[1]{0}', space=sflag, size = 0x4, scoped, tag = 'scoped memory for tpu_custom_call.1']
    #allocation11 [shape = 'u8[4096]{0}', space=vmem, size = 0x1000, scoped, tag = 'output window, operand 0, single buffered']
    %12 = vsyncpa [#allocation4], 0
    %13 = vsyncpa [#allocation7], 0
    %14 = vsyncpa [#allocation10], 0
    %15 = vsyncpa [#allocation5], 0
    // Predicated region
    $region2: #{tpu_custom_call.1} parent=1 // pred_check
      _
    $region3: #{tpu_custom_call.1} parent=1 // pred_check_branch
      %17 = sbr.rel (0) target = $region5
    $region4: #{tpu_custom_call.1} parent=1 // pred_region
      %s19 = ssub.s32 64, 64
      %20 = vsyncadd [#allocation4], %s19
      %s22 = sshll.u32 [#allocation3], 4
      %s23 = int_to_ptr.vmem [resolvable:$true] %s22
      %25 = dma.hbm_to_vmem [thread:$0]  %s0, 64, %s23, [#allocation4]
    $region5: #{tpu_custom_call.1} parent=1 // pred_fallthru
      _
    // Predicated region
    $region6: #{tpu_custom_call.1} parent=1 // pred_check
      _
    $region7: #{tpu_custom_call.1} parent=1 // pred_check_branch
      %27 = sbr.rel (0) target = $region9
    $region8: #{tpu_custom_call.1} parent=1 // pred_region
      %s29 = ssub.s32 1024, 1024
      %30 = vsyncadd [#allocation7], %s29
      %s31 = sshll.u32 [#allocation6], 4
      %s32 = int_to_ptr.vmem [resolvable:$true] %s31
      %37 = dma.hbm_to_vmem [thread:$0]  %s1, 1024, %s32, [#allocation7], 64, 64, 4
    $region9: #{tpu_custom_call.1} parent=1 // pred_fallthru
      _
    // Predicated region
    $region10: #{tpu_custom_call.1} parent=1 // pred_check
      _
    $region11: #{tpu_custom_call.1} parent=1 // pred_check_branch
      %39 = sbr.rel (0) target = $region13
    $region12: #{tpu_custom_call.1} parent=1 // pred_region
      _
    $region13: #{tpu_custom_call.1} parent=1 // pred_fallthru
      _
    // Predicated region
    $region14: #{tpu_custom_call.1} parent=1 // pred_check
      _
    $region15: #{tpu_custom_call.1} parent=1 // pred_check_branch
      %41 = sbr.rel (0) target = $region17
    $region16: #{tpu_custom_call.1} parent=1 // pred_region
      %s43 = ssub.s32 1024, 1024
      %44 = vsyncadd [#allocation7], %s43
      %s45 = sshll.u32 [#allocation8], 4
      %s46 = int_to_ptr.vmem [resolvable:$true] %s45
      %51 = dma.hbm_to_vmem [thread:$0]  %s3, 1024, %s46, [#allocation7], 64, 64, 4
    $region17: #{tpu_custom_call.1} parent=1 // pred_fallthru
      _
    // Predicated region
    $region18: #{tpu_custom_call.1} parent=1 // pred_check
      _
    $region19: #{tpu_custom_call.1} parent=1 // pred_check_branch
      %53 = sbr.rel (0) target = $region21
    $region20: #{tpu_custom_call.1} parent=1 // pred_region
      _
    $region21: #{tpu_custom_call.1} parent=1 // pred_fallthru
      _
    // Predicated region
    $region22: #{tpu_custom_call.1} parent=1 // pred_check
      _
    $region23: #{tpu_custom_call.1} parent=1 // pred_check_branch
      %55 = sbr.rel (0) target = $region25
    $region24: #{tpu_custom_call.1} parent=1 // pred_region
      %s57 = ssub.s32 1024, 1024
      %58 = vsyncadd [#allocation10], %s57
      %s59 = sshll.u32 [#allocation9], 4
      %s60 = int_to_ptr.vmem [resolvable:$true] %s59
      %65 = dma.hbm_to_vmem [thread:$0]  %s5, 1024, %s60, [#allocation10], 64, 64, 4
    $region25: #{tpu_custom_call.1} parent=1 // pred_fallthru
      _
    // Predicated region
    $region26: #{tpu_custom_call.1} parent=1 // pred_check
      _
    $region27: #{tpu_custom_call.1} parent=1 // pred_check_branch
      %67 = sbr.rel (0) target = $region29
    $region28: #{tpu_custom_call.1} parent=1 // pred_region
      _
    $region29: #{tpu_custom_call.1} parent=1 // pred_fallthru
      _
    // Predicated region
    $region30: #{tpu_custom_call.1} parent=1 // pred_check
      _
    $region31: #{tpu_custom_call.1} parent=1 // pred_check_branch
      %69 = sbr.rel (0) target = $region33
    $region32: #{tpu_custom_call.1} parent=1 // pred_region
      %70 = dma.done [#allocation4], 64
    $region33: #{tpu_custom_call.1} parent=1 // pred_fallthru
      _
    // Predicated region
    $region34: #{tpu_custom_call.1} parent=1 // pred_check
      _
    $region35: #{tpu_custom_call.1} parent=1 // pred_check_branch
      %72 = sbr.rel (0) target = $region37
    $region36: #{tpu_custom_call.1} parent=1 // pred_region
      %73 = dma.done [#allocation7], 1024
    $region37: #{tpu_custom_call.1} parent=1 // pred_fallthru
      _
    // Predicated region
    $region38: #{tpu_custom_call.1} parent=1 // pred_check
      _
    $region39: #{tpu_custom_call.1} parent=1 // pred_check_branch
      %75 = sbr.rel (0) target = $region41
    $region40: #{tpu_custom_call.1} parent=1 // pred_region
      %76 = dma.done [#allocation7], 1024
    $region41: #{tpu_custom_call.1} parent=1 // pred_fallthru
      _
    // Predicated region
    $region42: #{tpu_custom_call.1} parent=1 // pred_check
      _
    $region43: #{tpu_custom_call.1} parent=1 // pred_check_branch
      %78 = sbr.rel (0) target = $region45
    $region44: #{tpu_custom_call.1} parent=1 // pred_region
      %79 = dma.done [#allocation10], 1024
    $region45: #{tpu_custom_call.1} parent=1 // pred_fallthru
      _
    %p81 = scmp.eq.s32.totalorder 0, 0
    // Predicated region
    $region46: #{tpu_custom_call.1} parent=1 // pred_check
      %p82 = pneg %p81
    $region47: #{tpu_custom_call.1} parent=1 // pred_check_branch
      %84 = sbr.rel (%p82) target = $region49
    $region48: #{tpu_custom_call.1} parent=1 // pred_region
      %85 = vst [vmem:[#allocation2] sm:$0xff] 0.0
    $region49: #{tpu_custom_call.1} parent=1 // pred_fallthru
      _
    %v86 = vld [vmem:[#allocation3] sm:$0xf]
    %v87 = vld [vmem:[#allocation6] sm:$0xf]
    %v88 = vld [vmem:[#allocation6 + $0x4] sm:$0xf]
    %v89 = vld [vmem:[#allocation6 + $0x8] sm:$0xf]
    %v90 = vld [vmem:[#allocation6 + $0xc] sm:$0xf]
    %v91 = vld [vmem:[#allocation6 + $0x10] sm:$0xf]
    %v92 = vld [vmem:[#allocation6 + $0x14] sm:$0xf]
    %v93 = vld [vmem:[#allocation6 + $0x18] sm:$0xf]
    %v94 = vld [vmem:[#allocation6 + $0x1c] sm:$0xf]
    %v95 = vld [vmem:[#allocation6 + $0x20] sm:$0xf]
    %v96 = vld [vmem:[#allocation6 + $0x24] sm:$0xf]
    %v97 = vld [vmem:[#allocation6 + $0x28] sm:$0xf]
    %v98 = vld [vmem:[#allocation6 + $0x2c] sm:$0xf]
    %v99 = vld [vmem:[#allocation6 + $0x30] sm:$0xf]
    %v100 = vld [vmem:[#allocation6 + $0x34] sm:$0xf]
    %v101 = vld [vmem:[#allocation6 + $0x38] sm:$0xf]
    %v102 = vld [vmem:[#allocation6 + $0x3c] sm:$0xf]
    %v103 = vld [vmem:[%s2] sm:$0x1]
    %v105 = vlaneseq
    %v106 = vshrl.u32 %v105, 7
    %v107 = vsub.s32 0, %v106
    %v108 = vrot.slane %v103, %v107
    %v126 = vunpack.c.l.b16 %v87
    %v127 = vunpack.c.l.b16 %v88
    %v128 = vunpack.c.l.b16 %v89
    %v129 = vunpack.c.l.b16 %v90
    %v130 = vunpack.c.l.b16 %v91
    %v131 = vunpack.c.l.b16 %v92
    %v132 = vunpack.c.l.b16 %v93
    %v133 = vunpack.c.l.b16 %v94
    %v134 = vunpack.c.l.b16 %v95
    %v135 = vunpack.c.l.b16 %v96
    %v136 = vunpack.c.l.b16 %v97
    %v137 = vunpack.c.l.b16 %v98
    %v138 = vunpack.c.l.b16 %v99
    %v139 = vunpack.c.l.b16 %v100
    %v140 = vunpack.c.l.b16 %v101
    %v141 = vunpack.c.l.b16 %v102
    %v142 = vpack.c.b16 %v127, %v126
    %v143 = vpack.c.b16 %v129, %v128
    %v144 = vpack.c.b16 %v131, %v130
    %v145 = vpack.c.b16 %v133, %v132
    %v146 = vpack.c.b16 %v135, %v134
    %v147 = vpack.c.b16 %v137, %v136
    %v148 = vpack.c.b16 %v139, %v138
    %v149 = vpack.c.b16 %v141, %v140
    %158 = vmatprep.subr.bf16.mxu0 0
    %159 = vmatpush1.bf16.msra.mxu0 %v142
    %160 = vmatprep.subr.bf16.mxu0 0
    %161 = vmatpush1.bf16.msra.mxu0 %v143
    %162 = vmatprep.subr.bf16.mxu0 0
    %163 = vmatpush1.bf16.msra.mxu0 %v144
    %164 = vmatprep.subr.bf16.mxu0 0
    %165 = vmatpush1.bf16.msra.mxu0 %v145
    %166 = vmatprep.subr.bf16.mxu0 0
    %167 = vmatpush1.bf16.msra.mxu0 %v146
    %168 = vmatprep.subr.bf16.mxu0 0
    %169 = vmatpush1.bf16.msra.mxu0 %v147
    %170 = vmatprep.subr.bf16.mxu0 0
    %171 = vmatpush1.bf16.msra.mxu0 %v148
    %172 = vmatprep.subr.bf16.mxu0 0
    %173 = vmatpush1.bf16.msra.mxu0 %v149
    %174 = vmatprep.subr.bf16.mxu0 0
    %175 = vmatpush1.bf16.msra.mxu0 0
    %176 = vmatprep.subr.bf16.mxu0 0
    %177 = vmatpush1.bf16.msra.mxu0 0
    %178 = vmatprep.subr.bf16.mxu0 0
    %179 = vmatpush1.bf16.msra.mxu0 0
    %180 = vmatprep.subr.bf16.mxu0 0
    %181 = vmatpush1.bf16.msra.mxu0 0
    %182 = vmatprep.subr.bf16.mxu0 0
    %183 = vmatpush1.bf16.msra.mxu0 0
    %184 = vmatprep.subr.bf16.mxu0 0
    %185 = vmatpush1.bf16.msra.mxu0 0
    %186 = vmatprep.subr.bf16.mxu0 0
    %187 = vmatpush1.bf16.msra.mxu0 0
    %188 = vmatprep.subr.bf16.mxu0 0
    %189 = vmatpush1.bf16.msra.mxu0 0
    %190 = vmatprep.mubr.bf16.mxu0 0
    %191 = vmatmul.mubr.bf16.gmra.mrb[0].mxu0 %v86
    %v192 = vpop.f32.mrb[0].mxu0
    %v193 = vadd.f32 %v108, %v192
    %v194 = vpop.f32.mrb[0].mxu0
    %v195 = vpop.f32.mrb[0].mxu0
    %v196 = vpop.f32.mrb[0].mxu0
    %197 = vdwg.mxu0
    %v198 = vld [vmem:[#allocation8] sm:$0xf]
    %v199 = vld [vmem:[#allocation8 + $0x4] sm:$0xf]
    %v200 = vld [vmem:[#allocation8 + $0x8] sm:$0xf]
    %v201 = vld [vmem:[#allocation8 + $0xc] sm:$0xf]
    %v202 = vld [vmem:[#allocation8 + $0x10] sm:$0xf]
    %v203 = vld [vmem:[#allocation8 + $0x14] sm:$0xf]
    %v204 = vld [vmem:[#allocation8 + $0x18] sm:$0xf]
    %v205 = vld [vmem:[#allocation8 + $0x1c] sm:$0xf]
    %v206 = vld [vmem:[#allocation8 + $0x20] sm:$0xf]
    %v207 = vld [vmem:[#allocation8 + $0x24] sm:$0xf]
    %v208 = vld [vmem:[#allocation8 + $0x28] sm:$0xf]
    %v209 = vld [vmem:[#allocation8 + $0x2c] sm:$0xf]
    %v210 = vld [vmem:[#allocation8 + $0x30] sm:$0xf]
    %v211 = vld [vmem:[#allocation8 + $0x34] sm:$0xf]
    %v212 = vld [vmem:[#allocation8 + $0x38] sm:$0xf]
    %v213 = vld [vmem:[#allocation8 + $0x3c] sm:$0xf]
    %v214 = vld [vmem:[%s4] sm:$0x1]
    %v216 = vlaneseq
    %v217 = vshrl.u32 %v216, 7
    %v218 = vsub.s32 0, %v217
    %v219 = vrot.slane %v214, %v218
    %v237 = vunpack.c.l.b16 %v198
    %v238 = vunpack.c.l.b16 %v199
    %v239 = vunpack.c.l.b16 %v200
    %v240 = vunpack.c.l.b16 %v201
    %v241 = vunpack.c.l.b16 %v202
    %v242 = vunpack.c.l.b16 %v203
    %v243 = vunpack.c.l.b16 %v204
    %v244 = vunpack.c.l.b16 %v205
    %v245 = vunpack.c.l.b16 %v206
    %v246 = vunpack.c.l.b16 %v207
    %v247 = vunpack.c.l.b16 %v208
    %v248 = vunpack.c.l.b16 %v209
    %v249 = vunpack.c.l.b16 %v210
    %v250 = vunpack.c.l.b16 %v211
    %v251 = vunpack.c.l.b16 %v212
    %v252 = vunpack.c.l.b16 %v213
    %v253 = vpack.c.b16 %v238, %v237
    %v254 = vpack.c.b16 %v240, %v239
    %v255 = vpack.c.b16 %v242, %v241
    %v256 = vpack.c.b16 %v244, %v243
    %v257 = vpack.c.b16 %v246, %v245
    %v258 = vpack.c.b16 %v248, %v247
    %v259 = vpack.c.b16 %v250, %v249
    %v260 = vpack.c.b16 %v252, %v251
    %269 = vmatprep.subr.bf16.mxu0 0
    %270 = vmatpush1.bf16.msra.mxu0 %v253
    %271 = vmatprep.subr.bf16.mxu0 0
    %272 = vmatpush1.bf16.msra.mxu0 %v254
    %273 = vmatprep.subr.bf16.mxu0 0
    %274 = vmatpush1.bf16.msra.mxu0 %v255
    %275 = vmatprep.subr.bf16.mxu0 0
    %276 = vmatpush1.bf16.msra.mxu0 %v256
    %277 = vmatprep.subr.bf16.mxu0 0
    %278 = vmatpush1.bf16.msra.mxu0 %v257
    %279 = vmatprep.subr.bf16.mxu0 0
    %280 = vmatpush1.bf16.msra.mxu0 %v258
    %281 = vmatprep.subr.bf16.mxu0 0
    %282 = vmatpush1.bf16.msra.mxu0 %v259
    %283 = vmatprep.subr.bf16.mxu0 0
    %284 = vmatpush1.bf16.msra.mxu0 %v260
    %285 = vmatprep.subr.bf16.mxu0 0
    %286 = vmatpush1.bf16.msra.mxu0 0
    %287 = vmatprep.subr.bf16.mxu0 0
    %288 = vmatpush1.bf16.msra.mxu0 0
    %289 = vmatprep.subr.bf16.mxu0 0
    %290 = vmatpush1.bf16.msra.mxu0 0
    %291 = vmatprep.subr.bf16.mxu0 0
    %292 = vmatpush1.bf16.msra.mxu0 0
    %293 = vmatprep.subr.bf16.mxu0 0
    %294 = vmatpush1.bf16.msra.mxu0 0
    %295 = vmatprep.subr.bf16.mxu0 0
    %296 = vmatpush1.bf16.msra.mxu0 0
    %297 = vmatprep.subr.bf16.mxu0 0
    %298 = vmatpush1.bf16.msra.mxu0 0
    %299 = vmatprep.subr.bf16.mxu0 0
    %300 = vmatpush1.bf16.msra.mxu0 0
    %301 = vmatprep.mubr.bf16.mxu0 0
    %302 = vmatmul.mubr.bf16.gmra.mrb[0].mxu0 %v86
    %v303 = vpop.f32.mrb[0].mxu0
    %v304 = vadd.f32 %v219, %v303
    %v305 = vpop.f32.mrb[0].mxu0
    %v306 = vpop.f32.mrb[0].mxu0
    %v307 = vpop.f32.mrb[0].mxu0
    %308 = vdwg.mxu0
    %v309 = vxor.u32 %v193, 2147483648
    %v310 = vmul.f32 %v309, 1.442695
    %v311 = vpow.pop %v310
    %v312 = vadd.f32 %v311, 1.0
    %v313 = vrcp.pop %v312
    %v314 = vmul.f32 1.0, %v313
    %v315 = vmul.f32 %v193, %v314
    %v316 = vmul.f32 %v315, %v304
    %v317 = vpack.c.bf16 %v316, %v316
    %v318 = vld [vmem:[#allocation2] sm:$0xff]
    %v319 = vld [vmem:[#allocation9] sm:$0xf]
    %v320 = vld [vmem:[#allocation9 + $0x4] sm:$0xf]
    %v321 = vld [vmem:[#allocation9 + $0x8] sm:$0xf]
    %v322 = vld [vmem:[#allocation9 + $0xc] sm:$0xf]
    %v323 = vld [vmem:[#allocation9 + $0x10] sm:$0xf]
    %v324 = vld [vmem:[#allocation9 + $0x14] sm:$0xf]
    %v325 = vld [vmem:[#allocation9 + $0x18] sm:$0xf]
    %v326 = vld [vmem:[#allocation9 + $0x1c] sm:$0xf]
    %v327 = vld [vmem:[#allocation9 + $0x20] sm:$0xf]
    %v328 = vld [vmem:[#allocation9 + $0x24] sm:$0xf]
    %v329 = vld [vmem:[#allocation9 + $0x28] sm:$0xf]
    %v330 = vld [vmem:[#allocation9 + $0x2c] sm:$0xf]
    %v331 = vld [vmem:[#allocation9 + $0x30] sm:$0xf]
    %v332 = vld [vmem:[#allocation9 + $0x34] sm:$0xf]
    %v333 = vld [vmem:[#allocation9 + $0x38] sm:$0xf]
    %v334 = vld [vmem:[#allocation9 + $0x3c] sm:$0xf]
    %v351 = vunpack.c.l.b16 %v319
    %v352 = vunpack.c.l.b16 %v320
    %v353 = vunpack.c.l.b16 %v321
    %v354 = vunpack.c.l.b16 %v322
    %v355 = vunpack.c.l.b16 %v323
    %v356 = vunpack.c.l.b16 %v324
    %v357 = vunpack.c.l.b16 %v325
    %v358 = vunpack.c.l.b16 %v326
    %v359 = vunpack.c.l.b16 %v327
    %v360 = vunpack.c.l.b16 %v328
    %v361 = vunpack.c.l.b16 %v329
    %v362 = vunpack.c.l.b16 %v330
    %v363 = vunpack.c.l.b16 %v331
    %v364 = vunpack.c.l.b16 %v332
    %v365 = vunpack.c.l.b16 %v333
    %v366 = vunpack.c.l.b16 %v334
    %v367 = vpack.c.b16 %v352, %v351
    %v368 = vpack.c.b16 %v354, %v353
    %v369 = vpack.c.b16 %v356, %v355
    %v370 = vpack.c.b16 %v358, %v357
    %v371 = vpack.c.b16 %v360, %v359
    %v372 = vpack.c.b16 %v362, %v361
    %v373 = vpack.c.b16 %v364, %v363
    %v374 = vpack.c.b16 %v366, %v365
    %383 = vmatprep.subr.bf16.mxu0 0
    %384 = vmatpush1.bf16.msra.mxu0 %v367
    %385 = vmatprep.subr.bf16.mxu0 0
    %386 = vmatpush1.bf16.msra.mxu0 %v368
    %387 = vmatprep.subr.bf16.mxu0 0
    %388 = vmatpush1.bf16.msra.mxu0 %v369
    %389 = vmatprep.subr.bf16.mxu0 0
    %390 = vmatpush1.bf16.msra.mxu0 %v370
    %391 = vmatprep.subr.bf16.mxu0 0
    %392 = vmatpush1.bf16.msra.mxu0 %v371
    %393 = vmatprep.subr.bf16.mxu0 0
    %394 = vmatpush1.bf16.msra.mxu0 %v372
    %395 = vmatprep.subr.bf16.mxu0 0
    %396 = vmatpush1.bf16.msra.mxu0 %v373
    %397 = vmatprep.subr.bf16.mxu0 0
    %398 = vmatpush1.bf16.msra.mxu0 %v374
    %399 = vmatprep.subr.bf16.mxu0 0
    %400 = vmatpush1.bf16.msra.mxu0 0
    %401 = vmatprep.subr.bf16.mxu0 0
    %402 = vmatpush1.bf16.msra.mxu0 0
    %403 = vmatprep.subr.bf16.mxu0 0
    %404 = vmatpush1.bf16.msra.mxu0 0
    %405 = vmatprep.subr.bf16.mxu0 0
    %406 = vmatpush1.bf16.msra.mxu0 0
    %407 = vmatprep.subr.bf16.mxu0 0
    %408 = vmatpush1.bf16.msra.mxu0 0
    %409 = vmatprep.subr.bf16.mxu0 0
    %410 = vmatpush1.bf16.msra.mxu0 0
    %411 = vmatprep.subr.bf16.mxu0 0
    %412 = vmatpush1.bf16.msra.mxu0 0
    %413 = vmatprep.subr.bf16.mxu0 0
    %414 = vmatpush1.bf16.msra.mxu0 0
    %415 = vmatprep.mubr.bf16.mxu0 0
    %416 = vmatmul.mubr.bf16.gmra.mrb[0].mxu0 %v317
    %v417 = vpop.f32.mrb[0].mxu0
    %v418 = vadd.f32 0.0, %v417
    %v419 = vpop.f32.mrb[0].mxu0
    %v420 = vpop.f32.mrb[0].mxu0
    %v421 = vpop.f32.mrb[0].mxu0
    %422 = vdwg.mxu0
    %v423 = vadd.f32 %v318, %v418
    %424 = vst [vmem:[#allocation2] sm:$0xff] %v423
    // Predicated region
    $region50: #{tpu_custom_call.1} parent=1 // pred_check
      %p425 = pneg %p81
    $region51: #{tpu_custom_call.1} parent=1 // pred_check_branch
      %427 = sbr.rel (%p425) target = $region53
    $region52: #{tpu_custom_call.1} parent=1 // pred_region
      %v428 = vld [vmem:[#allocation2] sm:$0xff]
      %v429 = vld [vmem:[%s6] sm:$0x1]
      %v431 = vlaneseq
      %v432 = vshrl.u32 %v431, 7
      %v433 = vsub.s32 0, %v432
      %v434 = vrot.slane %v429, %v433
      %v436 = vadd.f32 %v428, %v434
      %437 = vst [vmem:[#allocation11] sm:$0xff] %v436
    $region53: #{tpu_custom_call.1} parent=1 // pred_fallthru
      _
    // Predicated region
    $region54: #{tpu_custom_call.1} parent=1 // pred_check
      _
    $region55: #{tpu_custom_call.1} parent=1 // pred_check_branch
      %439 = sbr.rel (0) target = $region57
    $region56: #{tpu_custom_call.1} parent=1 // pred_region
      %s441 = ssub.s32 128, 128
      %442 = vsyncadd [#allocation5], %s441
      %s444 = sshll.u32 [#allocation11], 4
      %s445 = int_to_ptr.vmem [resolvable:$true] %s444
      %447 = dma.vmem_to_hbm [thread:$0]  %s445, 128, %s7, [#allocation5]
    $region57: #{tpu_custom_call.1} parent=1 // pred_fallthru
      _
    // Predicated region
    $region58: #{tpu_custom_call.1} parent=1 // pred_check
      _
    $region59: #{tpu_custom_call.1} parent=1 // pred_check_branch
      %449 = sbr.rel (0) target = $region61
    $region60: #{tpu_custom_call.1} parent=1 // pred_region
      %450 = dma.done [#allocation5], 128
    $region61: #{tpu_custom_call.1} parent=1 // pred_fallthru
      _
    %451 = vsyncpa [#allocation4], 1
    %452 = vsyncpa [#allocation7], 1
    %453 = vsyncpa [#allocation10], 1
    %454 = vsyncpa [#allocation5], 1

</llo_original>
